<compile_context>
chip_gen: v7x
topology: tpu7x:2x2x1
jax: 0.10.0
libtpu: 0.0.40
codegen_flags: <defaults>
</compile_context>

<pallas_src>
import jax
import jax.numpy as jnp
from jax.experimental import pallas as pl
from jax.experimental.pallas import tpu as pltpu

HEADS = 4
LEAKY_GAT = 0.2     # GATv2Conv default negative_slope
LEAKY_OUT = 0.01    # F.leaky_relu_ default negative_slope
BN_EPS = 1e-5
NEG_INF = -1e30


def gcnn_kernel(x_ref, xslab_ref, src_oh_ref, dst_oh_ref, dst_t_ref,
                wlr_ref, blr_ref, att_ref, hseg_ref, hexp_ref, gbias_ref,
                convw_ref, convb_ref, gamma_ref, beta_ref,
                out_ref, alpha_ref):
    N, D = out_ref.shape
    Dh = D // 2
    f32 = jnp.float32
    bf16 = jnp.bfloat16

    src_oh = src_oh_ref[...]            # [E, N] bf16 one-hot of edge sources
    dst_oh = dst_oh_ref[...]            # [E, N] bf16 one-hot of edge destinations
    dst_t = dst_t_ref[...]              # [N, E] bf16 (destination one-hot, transposed on host)
    mask_b = dst_t > 0                  # [N, E] bool, computed once (hoisted)

    # ---------------- GATv2Conv ----------------
    # fused lin_l / lin_r: one [N, D] @ [D, 2*Dh] matmul, then static split
    xlr = jnp.dot(x_ref[...], wlr_ref[...], preferred_element_type=f32) + blr_ref[...]
    xl = xlr[:, :Dh]                    # [N, Dh] source-side features
    xr = xlr[:, Dh:]                    # [N, Dh] destination-side features

    # edge gathers as one-hot matmuls (bf16 operands, f32 accumulation)
    xj = jnp.dot(src_oh, xl.astype(bf16), preferred_element_type=f32)   # [E, Dh]
    xi = jnp.dot(dst_oh, xr.astype(bf16), preferred_element_type=f32)   # [E, Dh]

    s = xi + xj
    s = jnp.where(s > 0, s, LEAKY_GAT * s)                              # leaky_relu(0.2)

    # per-head scores, all heads at once: segment-sum via [Dh, H] 0/1 matmul
    a = jnp.dot(s * att_ref[...], hseg_ref[...], preferred_element_type=f32)  # [E, H]
    a_t = a.T                                                                  # [H, E] (lane-dense on E)

    # scatter-softmax over destinations, all heads in ONE masked pass
    bc = jnp.where(mask_b[None, :, :], a_t[:, None, :], NEG_INF)       # [H, N, E]
    m_dst = jnp.max(bc, axis=-1)                                       # [H, N] per-dst max
    m_e = jnp.dot(m_dst.astype(bf16), dst_t, preferred_element_type=f32)   # [H, E] gather to edges
    e_t = jnp.exp(a_t - m_e)                                               # [H, E]
    den = jnp.dot(e_t.astype(bf16), dst_oh, preferred_element_type=f32)    # [H, N] scatter-sum
    den_e = jnp.dot(den.astype(bf16), dst_t, preferred_element_type=f32)   # [H, E] gather back
    alpha_t = e_t * pl.reciprocal(den_e, approx=True)                      # [H, E]
    alpha_ref[...] = alpha_t            # lane-dense [HEADS, E] store

    # weighted scatter of source features to destinations: single wide matmul
    alpha_b = jnp.dot(alpha_t.T, hexp_ref[...], preferred_element_type=f32)  # [E, Dh]
    weighted = (xj * alpha_b).astype(bf16)                                    # [E, Dh]
    x1 = jnp.dot(dst_t, weighted, preferred_element_type=f32) + gbias_ref[...]  # [N, Dh]

    # ------- BatchNorm1d (training-mode batch stats) + leaky_relu(0.01) -------
    mu = jnp.mean(x1, axis=0, keepdims=True)
    var = jnp.mean((x1 - mu) ** 2, axis=0, keepdims=True)               # biased var
    x1 = (x1 - mu) * jax.lax.rsqrt(var + BN_EPS)
    x1 = x1 * gamma_ref[...] + beta_ref[...]
    x1 = jnp.where(x1 > 0, x1, LEAKY_OUT * x1)
    out_ref[:, :Dh] = x1                # direct slice store (no concatenate copy)

    # ------- Conv1d(D -> D/2, k=3, pad=1) on x.T as ONE slab matmul + ReLU ----
    x2 = jnp.dot(xslab_ref[...], convw_ref[...],
                 preferred_element_type=f32) + convb_ref[...]           # [N, Dh]
    out_ref[:, Dh:] = jnp.maximum(x2, 0.0)


def _full_spec(shape):
    nd = len(shape)
    return pl.BlockSpec(shape, lambda i, _nd=nd: (0,) * _nd)


def _vmem_limit_bytes(n, e, d):
    """Rough VMEM budget for the single-block path, clamped to a v7x-safe limit."""
    h = HEADS
    dh = d // 2
    est = 4 * h * n * e              # [H, N, E] masked-max broadcast (f32)
    est += 3 * 2 * e * n             # bf16 one-hot gather/scatter matrices
    est += 10 * 4 * e * dh           # edge-major f32 temporaries (xj, xi, s, ...)
    est += 8 * 4 * n * d             # node-major slabs / projections / outputs
    est += 8 * 4 * h * max(n, e)     # [H, N] / [H, E] softmax temporaries
    return int(min(max(2 * est, 32 * 1024 * 1024), 48 * 1024 * 1024))


def gcnn_forward(x, edge_index, params):
    """x: [N, D] float32 node features, edge_index: [2, E] int32 (src; dst)."""
    # TODO(synk): for large graphs, replace the one-hot matmul gather/scatter with an
    # edge-tiled PrefetchScalarGridSpec path (scalar-prefetched edge_index, VMEM
    # accumulators, pl.when init/finalize) so the kernel pipelines and both v7x
    # TensorCores get work; this single-block path is the small-graph fast path.
    N, D = x.shape
    E = edge_index.shape[1]
    Dh = D // 2
    C = Dh // HEADS
    bf16 = jnp.bfloat16

    src, dst = edge_index[0], edge_index[1]

    # ---- host-side glue (plain XLA ops, kept off the kernel critical path) ----
    src_oh = jax.nn.one_hot(src, N, dtype=bf16)                        # [E, N]
    dst_oh = jax.nn.one_hot(dst, N, dtype=bf16)                        # [E, N]
    dst_t = (jnp.arange(N)[:, None] == dst[None, :]).astype(bf16)      # [N, E] built transposed

    # shifted-window slab so the k=3 Conv1d becomes one matmul
    x_pad = jnp.pad(x, ((1, 1), (0, 0)))                               # [N+2, D]
    x_slab = jnp.concatenate([x_pad[0:N], x_pad[1:N + 1], x_pad[2:N + 2]],
                             axis=1).astype(bf16)                      # [N, 3D]
    conv_w = params["conv_w"].reshape(3 * D, Dh).astype(bf16)          # [3D, Dh]

    # fused GATv2 projections
    wlr = jnp.concatenate([params["wl"], params["wr"]], axis=1).astype(bf16)  # [D, 2*Dh]
    blr = jnp.concatenate([params["bl"], params["br"]], axis=1)               # [1, 2*Dh]

    # head-segment matrices (exact 0/1): per-head sum and per-head broadcast
    head_ids = jnp.arange(Dh) // C
    head_seg = (head_ids[:, None] == jnp.arange(HEADS)[None, :]).astype(jnp.float32)  # [Dh, H]
    head_exp = head_seg.T                                                               # [H, Dh]

    args = (x.astype(bf16), x_slab, src_oh, dst_oh, dst_t,
            wlr, blr, params["att"], head_seg, head_exp, params["gat_bias"],
            conv_w, params["conv_b"], params["bn_gamma"], params["bn_beta"])

    out, alpha_t = pl.pallas_call(
        gcnn_kernel,
        out_shape=(jax.ShapeDtypeStruct((N, D), jnp.float32),
                   jax.ShapeDtypeStruct((HEADS, E), jnp.float32)),
        grid=(1,),
        in_specs=[_full_spec(a.shape) for a in args],
        out_specs=(_full_spec((N, D)), _full_spec((HEADS, E))),
        compiler_params=pltpu.CompilerParams(
            dimension_semantics=("arbitrary",),
            vmem_limit_bytes=_vmem_limit_bytes(N, E, D)),
    )(*args)

    # mirror PyTorch return: (x, edge_weights, edge_data) with
    # edge_weights = (edge_index, alpha) per PyG return_attention_weights
    alpha = alpha_t.T                                                   # [E, HEADS]
    return out, (edge_index, alpha), edge_index


if __name__ == "__main__":
    key = jax.random.PRNGKey(0)
    N, D, E = 8, 32, 16
    Dh = D // 2
    ks = jax.random.split(key, 12)

    x = jax.random.normal(ks[0], (N, D), jnp.float32)
    src = jax.random.randint(ks[1], (E,), 0, N, dtype=jnp.int32)
    dst = jax.random.randint(ks[2], (E,), 0, N, dtype=jnp.int32)
    edge_index = jnp.stack([src, dst], axis=0)

    s = 0.1
    params = dict(
        wl=s * jax.random.normal(ks[3], (D, Dh), jnp.float32),      # GATv2 lin_l (pre-transposed)
        bl=s * jax.random.normal(ks[4], (1, Dh), jnp.float32),
        wr=s * jax.random.normal(ks[5], (D, Dh), jnp.float32),      # GATv2 lin_r (pre-transposed)
        br=s * jax.random.normal(ks[6], (1, Dh), jnp.float32),
        att=s * jax.random.normal(ks[7], (1, Dh), jnp.float32),     # (1, heads*C) attention vec
        gat_bias=s * jax.random.normal(ks[8], (1, Dh), jnp.float32),
        conv_w=s * jax.random.normal(ks[9], (3, D, Dh), jnp.float32),  # Conv1d weight as [k, C_in, C_out]
        conv_b=s * jax.random.normal(ks[10], (1, Dh), jnp.float32),
        bn_gamma=jnp.ones((1, Dh), jnp.float32),
        bn_beta=jnp.zeros((1, Dh), jnp.float32),
    )

    out, (ei, alpha), edge_data = gcnn_forward(x, edge_index, params)
    jax.block_until_ready(out)
    jax.block_until_ready(alpha)

    assert out.shape == (N, D), out.shape
    assert alpha.shape == (E, HEADS), alpha.shape
    assert bool(jnp.all(jnp.isfinite(out)))
    assert bool(jnp.all(jnp.isfinite(alpha)))
    print("KERNEL_OK")
</pallas_src>

<mosaic_0001>
module attributes {stable_mosaic.version = 11 : i64} {
  func.func @gcnn_kernel(%arg0: i32, %arg1: memref<8x32xbf16, #tpu.memory_space<vmem>>, %arg2: memref<8x96xbf16, #tpu.memory_space<vmem>>, %arg3: memref<16x8xbf16, #tpu.memory_space<vmem>>, %arg4: memref<16x8xbf16, #tpu.memory_space<vmem>>, %arg5: memref<8x16xbf16, #tpu.memory_space<vmem>>, %arg6: memref<32x32xbf16, #tpu.memory_space<vmem>>, %arg7: memref<1x32xf32, #tpu.memory_space<vmem>>, %arg8: memref<1x16xf32, #tpu.memory_space<vmem>>, %arg9: memref<16x4xf32, #tpu.memory_space<vmem>>, %arg10: memref<4x16xf32, #tpu.memory_space<vmem>>, %arg11: memref<1x16xf32, #tpu.memory_space<vmem>>, %arg12: memref<96x16xbf16, #tpu.memory_space<vmem>>, %arg13: memref<1x16xf32, #tpu.memory_space<vmem>>, %arg14: memref<1x16xf32, #tpu.memory_space<vmem>>, %arg15: memref<1x16xf32, #tpu.memory_space<vmem>>, %arg16: memref<8x32xf32, #tpu.memory_space<vmem>>, %arg17: memref<4x16xf32, #tpu.memory_space<vmem>>) attributes {dimension_semantics = [#tpu.dimension_semantics<arbitrary>], iteration_bounds = array<i64: 1>, scalar_prefetch = 0 : i64, scratch_operands = 0 : i64, tpu.core_type = #tpu.core_type<tc>, window_params = [{pipeline_mode = #tpu.pipeline_mode<synchronous>, transform_indices = @transform_0, window_bounds = array<i64: 8, 32>}, {pipeline_mode = #tpu.pipeline_mode<synchronous>, transform_indices = @transform_1, window_bounds = array<i64: 8, 96>}, {pipeline_mode = #tpu.pipeline_mode<synchronous>, transform_indices = @transform_2, window_bounds = array<i64: 16, 8>}, {pipeline_mode = #tpu.pipeline_mode<synchronous>, transform_indices = @transform_3, window_bounds = array<i64: 16, 8>}, {pipeline_mode = #tpu.pipeline_mode<synchronous>, transform_indices = @transform_4, window_bounds = array<i64: 8, 16>}, {pipeline_mode = #tpu.pipeline_mode<synchronous>, transform_indices = @transform_5, window_bounds = array<i64: 32, 32>}, {pipeline_mode = #tpu.pipeline_mode<synchronous>, transform_indices = @transform_6, window_bounds = array<i64: 1, 32>}, {pipeline_mode = #tpu.pipeline_mode<synchronous>, transform_indices = @transform_7, window_bounds = array<i64: 1, 16>}, {pipeline_mode = #tpu.pipeline_mode<synchronous>, transform_indices = @transform_8, window_bounds = array<i64: 16, 4>}, {pipeline_mode = #tpu.pipeline_mode<synchronous>, transform_indices = @transform_9, window_bounds = array<i64: 4, 16>}, {pipeline_mode = #tpu.pipeline_mode<synchronous>, transform_indices = @transform_10, window_bounds = array<i64: 1, 16>}, {pipeline_mode = #tpu.pipeline_mode<synchronous>, transform_indices = @transform_11, window_bounds = array<i64: 96, 16>}, {pipeline_mode = #tpu.pipeline_mode<synchronous>, transform_indices = @transform_12, window_bounds = array<i64: 1, 16>}, {pipeline_mode = #tpu.pipeline_mode<synchronous>, transform_indices = @transform_13, window_bounds = array<i64: 1, 16>}, {pipeline_mode = #tpu.pipeline_mode<synchronous>, transform_indices = @transform_14, window_bounds = array<i64: 1, 16>}, {pipeline_mode = #tpu.pipeline_mode<synchronous>, transform_indices = @transform_15, window_bounds = array<i64: 8, 32>}, {pipeline_mode = #tpu.pipeline_mode<synchronous>, transform_indices = @transform_16, window_bounds = array<i64: 4, 16>}]} {
    %c0 = arith.constant 0 : index
    %c0_0 = arith.constant 0 : index
    %0 = vector.load %arg3[%c0, %c0_0] : memref<16x8xbf16, #tpu.memory_space<vmem>>, vector<16x8xbf16>
    %c0_1 = arith.constant 0 : index
    %c0_2 = arith.constant 0 : index
    %1 = vector.load %arg4[%c0_1, %c0_2] : memref<16x8xbf16, #tpu.memory_space<vmem>>, vector<16x8xbf16>
    %c0_3 = arith.constant 0 : index
    %c0_4 = arith.constant 0 : index
    %2 = vector.load %arg5[%c0_3, %c0_4] : memref<8x16xbf16, #tpu.memory_space<vmem>>, vector<8x16xbf16>
    %cst = arith.constant 0.000000e+00 : bf16
    %3 = vector.broadcast %cst : bf16 to vector<8x16xbf16>
    %4 = arith.cmpf ogt, %2, %3 : vector<8x16xbf16>
    %c0_5 = arith.constant 0 : index
    %c0_6 = arith.constant 0 : index
    %5 = vector.load %arg1[%c0_5, %c0_6] : memref<8x32xbf16, #tpu.memory_space<vmem>>, vector<8x32xbf16>
    %c0_7 = arith.constant 0 : index
    %c0_8 = arith.constant 0 : index
    %6 = vector.load %arg6[%c0_7, %c0_8] : memref<32x32xbf16, #tpu.memory_space<vmem>>, vector<32x32xbf16>
    %cst_9 = arith.constant dense<0.000000e+00> : vector<8x32xf32>
    %7 = tpu.matmul %5, %6, %cst_9 {dimension_numbers = #tpu.dot_dimension_numbers<[1], [0], [0], [1], [0, 0, 1, 1], [], []>} : vector<8x32xbf16>, vector<32x32xbf16>, vector<8x32xf32> -> vector<8x32xf32>
    %c0_10 = arith.constant 0 : index
    %c0_11 = arith.constant 0 : index
    %8 = vector.load %arg7[%c0_10, %c0_11] : memref<1x32xf32, #tpu.memory_space<vmem>>, vector<1x32xf32>
    %9 = vector.broadcast %8 : vector<1x32xf32> to vector<8x32xf32>
    %10 = arith.addf %7, %9 : vector<8x32xf32>
    %11 = vector.extract_strided_slice %10 {offsets = [0, 0], sizes = [8, 16], strides = [1, 1]} : vector<8x32xf32> to vector<8x16xf32>
    %12 = vector.extract_strided_slice %10 {offsets = [0, 16], sizes = [8, 16], strides = [1, 1]} : vector<8x32xf32> to vector<8x16xf32>
    %13 = arith.truncf %11 : vector<8x16xf32> to vector<8x16xbf16>
    %cst_12 = arith.constant dense<0.000000e+00> : vector<16x16xf32>
    %14 = tpu.matmul %0, %13, %cst_12 {dimension_numbers = #tpu.dot_dimension_numbers<[1], [0], [0], [1], [0, 0, 1, 1], [], []>} : vector<16x8xbf16>, vector<8x16xbf16>, vector<16x16xf32> -> vector<16x16xf32>
    %15 = arith.truncf %12 : vector<8x16xf32> to vector<8x16xbf16>
    %cst_13 = arith.constant dense<0.000000e+00> : vector<16x16xf32>
    %16 = tpu.matmul %1, %15, %cst_13 {dimension_numbers = #tpu.dot_dimension_numbers<[1], [0], [0], [1], [0, 0, 1, 1], [], []>} : vector<16x8xbf16>, vector<8x16xbf16>, vector<16x16xf32> -> vector<16x16xf32>
    %17 = arith.addf %16, %14 : vector<16x16xf32>
    %cst_14 = arith.constant 0.000000e+00 : f32
    %18 = vector.broadcast %cst_14 : f32 to vector<16x16xf32>
    %19 = arith.cmpf ogt, %17, %18 : vector<16x16xf32>
    %cst_15 = arith.constant 2.000000e-01 : f32
    %20 = vector.broadcast %cst_15 : f32 to vector<16x16xf32>
    %21 = arith.mulf %20, %17 : vector<16x16xf32>
    %22 = arith.select %19, %17, %21 : vector<16x16xi1>, vector<16x16xf32>
    %c0_16 = arith.constant 0 : index
    %c0_17 = arith.constant 0 : index
    %23 = vector.load %arg8[%c0_16, %c0_17] : memref<1x16xf32, #tpu.memory_space<vmem>>, vector<1x16xf32>
    %24 = vector.broadcast %23 : vector<1x16xf32> to vector<16x16xf32>
    %25 = arith.mulf %22, %24 : vector<16x16xf32>
    %c0_18 = arith.constant 0 : index
    %c0_19 = arith.constant 0 : index
    %26 = vector.load %arg9[%c0_18, %c0_19] : memref<16x4xf32, #tpu.memory_space<vmem>>, vector<16x4xf32>
    %cst_20 = arith.constant dense<0.000000e+00> : vector<16x4xf32>
    %27 = tpu.matmul %25, %26, %cst_20 {dimension_numbers = #tpu.dot_dimension_numbers<[1], [0], [0], [1], [0, 0, 1, 1], [], []>} : vector<16x16xf32>, vector<16x4xf32>, vector<16x4xf32> -> vector<16x4xf32>
    %28 = tpu.transpose %27, [1, 0] : vector<16x4xf32> -> vector<4x16xf32>
    %29 = vector.shape_cast %4 : vector<8x16xi1> to vector<1x8x16xi1>
    %30 = vector.shape_cast %28 : vector<4x16xf32> to vector<4x1x16xf32>
    %cst_21 = arith.constant -1.000000e+30 : f32
    %31 = vector.shape_cast %29 : vector<1x8x16xi1> to vector<1x8x16xi1>
    %32 = vector.broadcast %31 : vector<1x8x16xi1> to vector<4x8x16xi1>
    %33 = vector.shape_cast %30 : vector<4x1x16xf32> to vector<4x1x16xf32>
    %34 = vector.broadcast %33 : vector<4x1x16xf32> to vector<4x8x16xf32>
    %35 = vector.broadcast %cst_21 : f32 to vector<4x8x16xf32>
    %36 = arith.select %32, %34, %35 : vector<4x8x16xi1>, vector<4x8x16xf32>
    %cst_22 = arith.constant dense<0xFF800000> : vector<4x8xf32>
    %37 = vector.multi_reduction <maximumf>, %36, %cst_22 [2] : vector<4x8x16xf32> to vector<4x8xf32>
    %38 = arith.truncf %37 : vector<4x8xf32> to vector<4x8xbf16>
    %cst_23 = arith.constant dense<0.000000e+00> : vector<4x16xf32>
    %39 = tpu.matmul %38, %2, %cst_23 {dimension_numbers = #tpu.dot_dimension_numbers<[1], [0], [0], [1], [0, 0, 1, 1], [], []>} : vector<4x8xbf16>, vector<8x16xbf16>, vector<4x16xf32> -> vector<4x16xf32>
    %40 = arith.subf %28, %39 : vector<4x16xf32>
    %41 = math.exp %40 : vector<4x16xf32>
    %42 = arith.truncf %41 : vector<4x16xf32> to vector<4x16xbf16>
    %cst_24 = arith.constant dense<0.000000e+00> : vector<4x8xf32>
    %43 = tpu.matmul %42, %1, %cst_24 {dimension_numbers = #tpu.dot_dimension_numbers<[1], [0], [0], [1], [0, 0, 1, 1], [], []>} : vector<4x16xbf16>, vector<16x8xbf16>, vector<4x8xf32> -> vector<4x8xf32>
    %44 = arith.truncf %43 : vector<4x8xf32> to vector<4x8xbf16>
    %cst_25 = arith.constant dense<0.000000e+00> : vector<4x16xf32>
    %45 = tpu.matmul %44, %2, %cst_25 {dimension_numbers = #tpu.dot_dimension_numbers<[1], [0], [0], [1], [0, 0, 1, 1], [], []>} : vector<4x8xbf16>, vector<8x16xbf16>, vector<4x16xf32> -> vector<4x16xf32>
    %46 = tpu.reciprocal %45 {approx = true} : vector<4x16xf32> -> vector<4x16xf32>
    %47 = arith.mulf %41, %46 : vector<4x16xf32>
    %c0_26 = arith.constant 0 : index
    %c0_27 = arith.constant 0 : index
    %48 = vector.load %arg17[%c0_26, %c0_27] : memref<4x16xf32, #tpu.memory_space<vmem>>, vector<4x16xf32>
    tpu.vector_store %arg17[%c0_26, %c0_27], %47 {strides = array<i32>} : memref<4x16xf32, #tpu.memory_space<vmem>>, vector<4x16xf32>,
    %49 = tpu.transpose %47, [1, 0] : vector<4x16xf32> -> vector<16x4xf32>
    %c0_28 = arith.constant 0 : index
    %c0_29 = arith.constant 0 : index
    %50 = vector.load %arg10[%c0_28, %c0_29] : memref<4x16xf32, #tpu.memory_space<vmem>>, vector<4x16xf32>
    %cst_30 = arith.constant dense<0.000000e+00> : vector<16x16xf32>
    %51 = tpu.matmul %49, %50, %cst_30 {dimension_numbers = #tpu.dot_dimension_numbers<[1], [0], [0], [1], [0, 0, 1, 1], [], []>} : vector<16x4xf32>, vector<4x16xf32>, vector<16x16xf32> -> vector<16x16xf32>
    %52 = arith.mulf %14, %51 : vector<16x16xf32>
    %53 = arith.truncf %52 : vector<16x16xf32> to vector<16x16xbf16>
    %cst_31 = arith.constant dense<0.000000e+00> : vector<8x16xf32>
    %54 = tpu.matmul %2, %53, %cst_31 {dimension_numbers = #tpu.dot_dimension_numbers<[1], [0], [0], [1], [0, 0, 1, 1], [], []>} : vector<8x16xbf16>, vector<16x16xbf16>, vector<8x16xf32> -> vector<8x16xf32>
    %c0_32 = arith.constant 0 : index
    %c0_33 = arith.constant 0 : index
    %55 = vector.load %arg11[%c0_32, %c0_33] : memref<1x16xf32, #tpu.memory_space<vmem>>, vector<1x16xf32>
    %56 = vector.broadcast %55 : vector<1x16xf32> to vector<8x16xf32>
    %57 = arith.addf %54, %56 : vector<8x16xf32>
    %cst_34 = arith.constant dense<0.000000e+00> : vector<16xf32>
    %58 = vector.multi_reduction <add>, %57, %cst_34 [0] : vector<8x16xf32> to vector<16xf32>
    %59 = vector.shape_cast %58 : vector<16xf32> to vector<1x16xf32>
    %cst_35 = arith.constant 8.000000e+00 : f32
    %60 = vector.broadcast %cst_35 : f32 to vector<1x16xf32>
    %61 = arith.divf %59, %60 : vector<1x16xf32>
    %62 = vector.broadcast %61 : vector<1x16xf32> to vector<8x16xf32>
    %63 = arith.subf %57, %62 : vector<8x16xf32>
    %64 = arith.mulf %63, %63 : vector<8x16xf32>
    %cst_36 = arith.constant dense<0.000000e+00> : vector<16xf32>
    %65 = vector.multi_reduction <add>, %64, %cst_36 [0] : vector<8x16xf32> to vector<16xf32>
    %66 = vector.shape_cast %65 : vector<16xf32> to vector<1x16xf32>
    %cst_37 = arith.constant 8.000000e+00 : f32
    %67 = vector.broadcast %cst_37 : f32 to vector<1x16xf32>
    %68 = arith.divf %66, %67 : vector<1x16xf32>
    %69 = vector.broadcast %61 : vector<1x16xf32> to vector<8x16xf32>
    %70 = arith.subf %57, %69 : vector<8x16xf32>
    %cst_38 = arith.constant 9.99999974E-6 : f32
    %71 = vector.broadcast %cst_38 : f32 to vector<1x16xf32>
    %72 = arith.addf %68, %71 : vector<1x16xf32>
    %73 = math.rsqrt %72 : vector<1x16xf32>
    %74 = vector.broadcast %73 : vector<1x16xf32> to vector<8x16xf32>
    %75 = arith.mulf %70, %74 : vector<8x16xf32>
    %c0_39 = arith.constant 0 : index
    %c0_40 = arith.constant 0 : index
    %76 = vector.load %arg14[%c0_39, %c0_40] : memref<1x16xf32, #tpu.memory_space<vmem>>, vector<1x16xf32>
    %77 = vector.broadcast %76 : vector<1x16xf32> to vector<8x16xf32>
    %78 = arith.mulf %75, %77 : vector<8x16xf32>
    %c0_41 = arith.constant 0 : index
    %c0_42 = arith.constant 0 : index
    %79 = vector.load %arg15[%c0_41, %c0_42] : memref<1x16xf32, #tpu.memory_space<vmem>>, vector<1x16xf32>
    %80 = vector.broadcast %79 : vector<1x16xf32> to vector<8x16xf32>
    %81 = arith.addf %78, %80 : vector<8x16xf32>
    %cst_43 = arith.constant 0.000000e+00 : f32
    %82 = vector.broadcast %cst_43 : f32 to vector<8x16xf32>
    %83 = arith.cmpf ogt, %81, %82 : vector<8x16xf32>
    %cst_44 = arith.constant 0.00999999977 : f32
    %84 = vector.broadcast %cst_44 : f32 to vector<8x16xf32>
    %85 = arith.mulf %84, %81 : vector<8x16xf32>
    %86 = arith.select %83, %81, %85 : vector<8x16xi1>, vector<8x16xf32>
    %c0_45 = arith.constant 0 : index
    %c0_46 = arith.constant 0 : index
    %87 = vector.load %arg16[%c0_45, %c0_46] : memref<8x32xf32, #tpu.memory_space<vmem>>, vector<8x16xf32>
    tpu.vector_store %arg16[%c0_45, %c0_46], %86 {strides = array<i32>} : memref<8x32xf32, #tpu.memory_space<vmem>>, vector<8x16xf32>,
    %c0_47 = arith.constant 0 : index
    %c0_48 = arith.constant 0 : index
    %88 = vector.load %arg2[%c0_47, %c0_48] : memref<8x96xbf16, #tpu.memory_space<vmem>>, vector<8x96xbf16>
    %c0_49 = arith.constant 0 : index
    %c0_50 = arith.constant 0 : index
    %89 = vector.load %arg12[%c0_49, %c0_50] : memref<96x16xbf16, #tpu.memory_space<vmem>>, vector<96x16xbf16>
    %cst_51 = arith.constant dense<0.000000e+00> : vector<8x16xf32>
    %90 = tpu.matmul %88, %89, %cst_51 {dimension_numbers = #tpu.dot_dimension_numbers<[1], [0], [0], [1], [0, 0, 1, 1], [], []>} : vector<8x96xbf16>, vector<96x16xbf16>, vector<8x16xf32> -> vector<8x16xf32>
    %c0_52 = arith.constant 0 : index
    %c0_53 = arith.constant 0 : index
    %91 = vector.load %arg13[%c0_52, %c0_53] : memref<1x16xf32, #tpu.memory_space<vmem>>, vector<1x16xf32>
    %92 = vector.broadcast %91 : vector<1x16xf32> to vector<8x16xf32>
    %93 = arith.addf %90, %92 : vector<8x16xf32>
    %cst_54 = arith.constant 0.000000e+00 : f32
    %94 = vector.broadcast %cst_54 : f32 to vector<8x16xf32>
    %95 = arith.maximumf %93, %94 : vector<8x16xf32>
    %c0_55 = arith.constant 0 : index
    %c16 = arith.constant 16 : index
    %96 = vector.load %arg16[%c0_55, %c16] : memref<8x32xf32, #tpu.memory_space<vmem>>, vector<8x16xf32>
    tpu.vector_store %arg16[%c0_55, %c16], %95 {strides = array<i32>} : memref<8x32xf32, #tpu.memory_space<vmem>>, vector<8x16xf32>,
    return
  }
  func.func @transform_0(%arg0: i32) -> (i32, i32) {
    %c0_i32 = arith.constant 0 : i32
    %c0_i32_0 = arith.constant 0 : i32
    %c0_i32_1 = arith.constant 0 : i32
    return %c0_i32, %c0_i32_0 : i32, i32
  }
  func.func @transform_1(%arg0: i32) -> (i32, i32) {
    %c0_i32 = arith.constant 0 : i32
    %c0_i32_0 = arith.constant 0 : i32
    %c0_i32_1 = arith.constant 0 : i32
    return %c0_i32, %c0_i32_0 : i32, i32
  }
  func.func @transform_2(%arg0: i32) -> (i32, i32) {
    %c0_i32 = arith.constant 0 : i32
    %c0_i32_0 = arith.constant 0 : i32
    %c0_i32_1 = arith.constant 0 : i32
    return %c0_i32, %c0_i32_0 : i32, i32
  }
  func.func @transform_3(%arg0: i32) -> (i32, i32) {
    %c0_i32 = arith.constant 0 : i32
    %c0_i32_0 = arith.constant 0 : i32
    %c0_i32_1 = arith.constant 0 : i32
    return %c0_i32, %c0_i32_0 : i32, i32
  }
  func.func @transform_4(%arg0: i32) -> (i32, i32) {
    %c0_i32 = arith.constant 0 : i32
    %c0_i32_0 = arith.constant 0 : i32
    %c0_i32_1 = arith.constant 0 : i32
    return %c0_i32, %c0_i32_0 : i32, i32
  }
  func.func @transform_5(%arg0: i32) -> (i32, i32) {
    %c0_i32 = arith.constant 0 : i32
    %c0_i32_0 = arith.constant 0 : i32
    %c0_i32_1 = arith.constant 0 : i32
    return %c0_i32, %c0_i32_0 : i32, i32
  }
  func.func @transform_6(%arg0: i32) -> (i32, i32) {
    %c0_i32 = arith.constant 0 : i32
    %c0_i32_0 = arith.constant 0 : i32
    %c0_i32_1 = arith.constant 0 : i32
    return %c0_i32, %c0_i32_0 : i32, i32
  }
  func.func @transform_7(%arg0: i32) -> (i32, i32) {
    %c0_i32 = arith.constant 0 : i32
    %c0_i32_0 = arith.constant 0 : i32
    %c0_i32_1 = arith.constant 0 : i32
    return %c0_i32, %c0_i32_0 : i32, i32
  }
  func.func @transform_8(%arg0: i32) -> (i32, i32) {
    %c0_i32 = arith.constant 0 : i32
    %c0_i32_0 = arith.constant 0 : i32
    %c0_i32_1 = arith.constant 0 : i32
    return %c0_i32, %c0_i32_0 : i32, i32
  }
  func.func @transform_9(%arg0: i32) -> (i32, i32) {
    %c0_i32 = arith.constant 0 : i32
    %c0_i32_0 = arith.constant 0 : i32
    %c0_i32_1 = arith.constant 0 : i32
    return %c0_i32, %c0_i32_0 : i32, i32
  }
  func.func @transform_10(%arg0: i32) -> (i32, i32) {
    %c0_i32 = arith.constant 0 : i32
    %c0_i32_0 = arith.constant 0 : i32
    %c0_i32_1 = arith.constant 0 : i32
    return %c0_i32, %c0_i32_0 : i32, i32
  }
  func.func @transform_11(%arg0: i32) -> (i32, i32) {
    %c0_i32 = arith.constant 0 : i32
    %c0_i32_0 = arith.constant 0 : i32
    %c0_i32_1 = arith.constant 0 : i32
    return %c0_i32, %c0_i32_0 : i32, i32
  }
  func.func @transform_12(%arg0: i32) -> (i32, i32) {
    %c0_i32 = arith.constant 0 : i32
    %c0_i32_0 = arith.constant 0 : i32
    %c0_i32_1 = arith.constant 0 : i32
    return %c0_i32, %c0_i32_0 : i32, i32
  }
  func.func @transform_13(%arg0: i32) -> (i32, i32) {
    %c0_i32 = arith.constant 0 : i32
    %c0_i32_0 = arith.constant 0 : i32
    %c0_i32_1 = arith.constant 0 : i32
    return %c0_i32, %c0_i32_0 : i32, i32
  }
  func.func @transform_14(%arg0: i32) -> (i32, i32) {
    %c0_i32 = arith.constant 0 : i32
    %c0_i32_0 = arith.constant 0 : i32
    %c0_i32_1 = arith.constant 0 : i32
    return %c0_i32, %c0_i32_0 : i32, i32
  }
  func.func @transform_15(%arg0: i32) -> (i32, i32) {
    %c0_i32 = arith.constant 0 : i32
    %c0_i32_0 = arith.constant 0 : i32
    %c0_i32_1 = arith.constant 0 : i32
    return %c0_i32, %c0_i32_0 : i32, i32
  }
  func.func @transform_16(%arg0: i32) -> (i32, i32) {
    %c0_i32 = arith.constant 0 : i32
    %c0_i32_0 = arith.constant 0 : i32
    %c0_i32_1 = arith.constant 0 : i32
    return %c0_i32, %c0_i32_0 : i32, i32
  }
}

</mosaic_0001>

<llo_original>
// kernel: tpu_custom_call.1
$region0: #{tpu_custom_call.1}
  #allocation0 [shape = 'u32[]', space=smem, size = 0x4, offset = 0x4, fixed_abs, tag = 'smem constant byte address 0x4 - core index']
  #allocation1 [shape = 'u32[144,128]{1,0:T(1,128)}', space=vmem, size = 0x12000, scoped, tag = 'internal scratch']
  %s0 = inlined_call_operand.vmem [shape: bf16[8,32], index: 0, kind: input, shape index: {}]
  %s1 = inlined_call_operand.vmem [shape: bf16[8,96], index: 1, kind: input, shape index: {}]
  %s2 = inlined_call_operand.vmem [shape: bf16[16,8], index: 2, kind: input, shape index: {}]
  %s3 = inlined_call_operand.vmem [shape: bf16[16,8], index: 3, kind: input, shape index: {}]
  %s4 = inlined_call_operand.vmem [shape: bf16[8,16], index: 4, kind: input, shape index: {}]
  %s5 = inlined_call_operand.vmem [shape: bf16[32,32], index: 5, kind: input, shape index: {}]
  %s6 = inlined_call_operand.vmem [shape: f32[1,32], index: 6, kind: input, shape index: {}]
  %s7 = inlined_call_operand.vmem [shape: f32[1,16], index: 7, kind: input, shape index: {}]
  %s8 = inlined_call_operand.vmem [shape: f32[16,4], index: 8, kind: input, shape index: {}]
  %s9 = inlined_call_operand.vmem [shape: f32[4,16], index: 9, kind: input, shape index: {}]
  %s10 = inlined_call_operand.vmem [shape: f32[1,16], index: 10, kind: input, shape index: {}]
  %s11 = inlined_call_operand.vmem [shape: bf16[96,16], index: 11, kind: input, shape index: {}]
  %s12 = inlined_call_operand.vmem [shape: f32[1,16], index: 12, kind: input, shape index: {}]
  %s13 = inlined_call_operand.vmem [shape: f32[1,16], index: 13, kind: input, shape index: {}]
  %s14 = inlined_call_operand.vmem [shape: f32[1,16], index: 14, kind: input, shape index: {}]
  %s15 = inlined_call_operand.hbm [shape: f32[8,32], index: 15, kind: output, shape index: {0}]
  %s16 = inlined_call_operand.hbm [shape: f32[4,16], index: 16, kind: output, shape index: {1}]
  %17 = xla_tuple %s15, %s16
  %s18 = sld [smem:[#allocation0]]
  $region78: #{tpu_custom_call.1} parent=0
    _
  %s20 = ssub.s32 1, %s18
  %s21 = scalar_select 0, %s20, %s18
  $region1: #{tpu_custom_call.1} parent=0
    #allocation2 [shape = 'u8[4096]{0}', space=vmem, size = 0x1000, scoped, tag = 'output window, operand 0, single buffered']
    #allocation3 [shape = 's32[1]{0}', space=sflag, size = 0x4, scoped, tag = 'scoped memory for tpu_custom_call.1']
    #allocation4 [shape = 'u8[2048]{0}', space=vmem, size = 0x800, scoped, tag = 'output window, operand 1, single buffered']
    #allocation5 [shape = 's32[1]{0}', space=sflag, size = 0x4, scoped, tag = 'scoped memory for tpu_custom_call.1']
    %22 = vsyncpa [#allocation3], 0
    %23 = vsyncpa [#allocation5], 0
    // Predicated region
    $region2: #{tpu_custom_call.1} parent=1 // pred_check
      _
    $region3: #{tpu_custom_call.1} parent=1 // pred_check_branch
      %25 = sbr.rel (0) target = $region5
    $region4: #{tpu_custom_call.1} parent=1 // pred_region
      _
    $region5: #{tpu_custom_call.1} parent=1 // pred_fallthru
      _
    // Predicated region
    $region6: #{tpu_custom_call.1} parent=1 // pred_check
      _
    $region7: #{tpu_custom_call.1} parent=1 // pred_check_branch
      %27 = sbr.rel (0) target = $region9
    $region8: #{tpu_custom_call.1} parent=1 // pred_region
      _
    $region9: #{tpu_custom_call.1} parent=1 // pred_fallthru
      _
    // Predicated region
    $region10: #{tpu_custom_call.1} parent=1 // pred_check
      _
    $region11: #{tpu_custom_call.1} parent=1 // pred_check_branch
      %29 = sbr.rel (0) target = $region13
    $region12: #{tpu_custom_call.1} parent=1 // pred_region
      _
    $region13: #{tpu_custom_call.1} parent=1 // pred_fallthru
      _
    // Predicated region
    $region14: #{tpu_custom_call.1} parent=1 // pred_check
      _
    $region15: #{tpu_custom_call.1} parent=1 // pred_check_branch
      %31 = sbr.rel (0) target = $region17
    $region16: #{tpu_custom_call.1} parent=1 // pred_region
      _
    $region17: #{tpu_custom_call.1} parent=1 // pred_fallthru
      _
    // Predicated region
    $region18: #{tpu_custom_call.1} parent=1 // pred_check
      _
    $region19: #{tpu_custom_call.1} parent=1 // pred_check_branch
      %33 = sbr.rel (0) target = $region21
    $region20: #{tpu_custom_call.1} parent=1 // pred_region
      _
    $region21: #{tpu_custom_call.1} parent=1 // pred_fallthru
      _
    // Predicated region
    $region22: #{tpu_custom_call.1} parent=1 // pred_check
      _
    $region23: #{tpu_custom_call.1} parent=1 // pred_check_branch
      %35 = sbr.rel (0) target = $region25
    $region24: #{tpu_custom_call.1} parent=1 // pred_region
      _
    $region25: #{tpu_custom_call.1} parent=1 // pred_fallthru
      _
    // Predicated region
    $region26: #{tpu_custom_call.1} parent=1 // pred_check
      _
    $region27: #{tpu_custom_call.1} parent=1 // pred_check_branch
      %37 = sbr.rel (0) target = $region29
    $region28: #{tpu_custom_call.1} parent=1 // pred_region
      _
    $region29: #{tpu_custom_call.1} parent=1 // pred_fallthru
      _
    // Predicated region
    $region30: #{tpu_custom_call.1} parent=1 // pred_check
      _
    $region31: #{tpu_custom_call.1} parent=1 // pred_check_branch
      %39 = sbr.rel (0) target = $region33
    $region32: #{tpu_custom_call.1} parent=1 // pred_region
      _
    $region33: #{tpu_custom_call.1} parent=1 // pred_fallthru
      _
    // Predicated region
    $region34: #{tpu_custom_call.1} parent=1 // pred_check
      _
    $region35: #{tpu_custom_call.1} parent=1 // pred_check_branch
      %41 = sbr.rel (0) target = $region37
    $region36: #{tpu_custom_call.1} parent=1 // pred_region
      _
    $region37: #{tpu_custom_call.1} parent=1 // pred_fallthru
      _
    // Predicated region
    $region38: #{tpu_custom_call.1} parent=1 // pred_check
      _
    $region39: #{tpu_custom_call.1} parent=1 // pred_check_branch
      %43 = sbr.rel (0) target = $region41
    $region40: #{tpu_custom_call.1} parent=1 // pred_region
      _
    $region41: #{tpu_custom_call.1} parent=1 // pred_fallthru
      _
    // Predicated region
    $region42: #{tpu_custom_call.1} parent=1 // pred_check
      _
    $region43: #{tpu_custom_call.1} parent=1 // pred_check_branch
      %45 = sbr.rel (0) target = $region45
    $region44: #{tpu_custom_call.1} parent=1 // pred_region
      _
    $region45: #{tpu_custom_call.1} parent=1 // pred_fallthru
      _
    // Predicated region
    $region46: #{tpu_custom_call.1} parent=1 // pred_check
      _
    $region47: #{tpu_custom_call.1} parent=1 // pred_check_branch
      %47 = sbr.rel (0) target = $region49
    $region48: #{tpu_custom_call.1} parent=1 // pred_region
      _
    $region49: #{tpu_custom_call.1} parent=1 // pred_fallthru
      _
    // Predicated region
    $region50: #{tpu_custom_call.1} parent=1 // pred_check
      _
    $region51: #{tpu_custom_call.1} parent=1 // pred_check_branch
      %49 = sbr.rel (0) target = $region53
    $region52: #{tpu_custom_call.1} parent=1 // pred_region
      _
    $region53: #{tpu_custom_call.1} parent=1 // pred_fallthru
      _
    // Predicated region
    $region54: #{tpu_custom_call.1} parent=1 // pred_check
      _
    $region55: #{tpu_custom_call.1} parent=1 // pred_check_branch
      %51 = sbr.rel (0) target = $region57
    $region56: #{tpu_custom_call.1} parent=1 // pred_region
      _
    $region57: #{tpu_custom_call.1} parent=1 // pred_fallthru
      _
    // Predicated region
    $region58: #{tpu_custom_call.1} parent=1 // pred_check
      _
    $region59: #{tpu_custom_call.1} parent=1 // pred_check_branch
      %53 = sbr.rel (0) target = $region61
    $region60: #{tpu_custom_call.1} parent=1 // pred_region
      _
    $region61: #{tpu_custom_call.1} parent=1 // pred_fallthru
      _
    %v57 = vld [vmem:[%s2] sm:$0xf]
    %v58 = vld [vmem:[%s2 + $0x4] sm:$0xf]
    %v59 = vld [vmem:[%s3] sm:$0xf]
    %v60 = vld [vmem:[%s3 + $0x4] sm:$0xf]
    %v61 = vld [vmem:[%s4] sm:$0xf]
    %vm62 = vcmp.gt.bf16.partialorder %v61, 0
    %v63 = vld [vmem:[%s0] sm:$0xf]
    %v64 = vld [vmem:[%s5] sm:$0xf]
    %v65 = vld [vmem:[%s5 + $0x4] sm:$0xf]
    %v66 = vld [vmem:[%s5 + $0x8] sm:$0xf]
    %v67 = vld [vmem:[%s5 + $0xc] sm:$0xf]
    %v68 = vld [vmem:[%s6] sm:$0x1]
    %v70 = vlaneseq
    %v71 = vshrl.u32 %v70, 7
    %v72 = vsub.s32 0, %v71
    %v73 = vrot.slane %v68, %v72
    %v79 = vunpack.c.l.b16 %v64
    %v80 = vunpack.c.l.b16 %v65
    %v81 = vunpack.c.l.b16 %v66
    %v82 = vunpack.c.l.b16 %v67
    %v83 = vpack.c.b16 %v80, %v79
    %v84 = vpack.c.b16 %v82, %v81
    %vm87 = vcmask 261120
    %v89 = vsel %vm87, %v63, 0
    %91 = vmatprep.subr.bf16.mxu0 0
    %92 = vmatpush1.bf16.msra.mxu0 %v83
    %93 = vmatprep.subr.bf16.mxu0 0
    %94 = vmatpush1.bf16.msra.mxu0 %v84
    %95 = vmatprep.subr.bf16.mxu0 0
    %96 = vmatpush1.bf16.msra.mxu0 0
    %97 = vmatprep.subr.bf16.mxu0 0
    %98 = vmatpush1.bf16.msra.mxu0 0
    %99 = vmatprep.subr.bf16.mxu0 0
    %100 = vmatpush1.bf16.msra.mxu0 0
    %101 = vmatprep.subr.bf16.mxu0 0
    %102 = vmatpush1.bf16.msra.mxu0 0
    %103 = vmatprep.subr.bf16.mxu0 0
    %104 = vmatpush1.bf16.msra.mxu0 0
    %105 = vmatprep.subr.bf16.mxu0 0
    %106 = vmatpush1.bf16.msra.mxu0 0
    %107 = vmatprep.subr.bf16.mxu0 0
    %108 = vmatpush1.bf16.msra.mxu0 0
    %109 = vmatprep.subr.bf16.mxu0 0
    %110 = vmatpush1.bf16.msra.mxu0 0
    %111 = vmatprep.subr.bf16.mxu0 0
    %112 = vmatpush1.bf16.msra.mxu0 0
    %113 = vmatprep.subr.bf16.mxu0 0
    %114 = vmatpush1.bf16.msra.mxu0 0
    %115 = vmatprep.subr.bf16.mxu0 0
    %116 = vmatpush1.bf16.msra.mxu0 0
    %117 = vmatprep.subr.bf16.mxu0 0
    %118 = vmatpush1.bf16.msra.mxu0 0
    %119 = vmatprep.subr.bf16.mxu0 0
    %120 = vmatpush1.bf16.msra.mxu0 0
    %121 = vmatprep.subr.bf16.mxu0 0
    %122 = vmatpush1.bf16.msra.mxu0 0
    %123 = vmatprep.mubr.bf16.mxu0 0
    %124 = vmatmul.mubr.bf16.gmra.mrb[0].mxu0 %v89
    %v125 = vpop.f32.mrb[0].mxu0
    %v126 = vadd.f32 %v73, %v125
    %v127 = vpop.f32.mrb[0].mxu0
    %v128 = vpop.f32.mrb[0].mxu0
    %v129 = vpop.f32.mrb[0].mxu0
    %130 = vdwg.mxu0
    %v131 = vpack.c.bf16 %v126, %v126
    %v134 = vunpack.c.l.b16 %v57
    %v135 = vunpack.c.l.b16 %v58
    %v136 = vpack.c.b16 %v135, %v134
    %vm137 = vcmask 64512
    %v139 = vsel %vm137, %v136, 0
    %vm141 = vcmask 1043456
    %v143 = vsel %vm141, %v131, 0
    %145 = vmatprep.subr.bf16.mxu0 0
    %146 = vmatpush1.bf16.msra.mxu0 %v143
    %147 = vmatprep.subr.bf16.mxu0 0
    %148 = vmatpush1.bf16.msra.mxu0 0
    %149 = vmatprep.subr.bf16.mxu0 0
    %150 = vmatpush1.bf16.msra.mxu0 0
    %151 = vmatprep.subr.bf16.mxu0 0
    %152 = vmatpush1.bf16.msra.mxu0 0
    %153 = vmatprep.subr.bf16.mxu0 0
    %154 = vmatpush1.bf16.msra.mxu0 0
    %155 = vmatprep.subr.bf16.mxu0 0
    %156 = vmatpush1.bf16.msra.mxu0 0
    %157 = vmatprep.subr.bf16.mxu0 0
    %158 = vmatpush1.bf16.msra.mxu0 0
    %159 = vmatprep.subr.bf16.mxu0 0
    %160 = vmatpush1.bf16.msra.mxu0 0
    %161 = vmatprep.subr.bf16.mxu0 0
    %162 = vmatpush1.bf16.msra.mxu0 0
    %163 = vmatprep.subr.bf16.mxu0 0
    %164 = vmatpush1.bf16.msra.mxu0 0
    %165 = vmatprep.subr.bf16.mxu0 0
    %166 = vmatpush1.bf16.msra.mxu0 0
    %167 = vmatprep.subr.bf16.mxu0 0
    %168 = vmatpush1.bf16.msra.mxu0 0
    %169 = vmatprep.subr.bf16.mxu0 0
    %170 = vmatpush1.bf16.msra.mxu0 0
    %171 = vmatprep.subr.bf16.mxu0 0
    %172 = vmatpush1.bf16.msra.mxu0 0
    %173 = vmatprep.subr.bf16.mxu0 0
    %174 = vmatpush1.bf16.msra.mxu0 0
    %175 = vmatprep.subr.bf16.mxu0 0
    %176 = vmatpush1.bf16.msra.mxu0 0
    %177 = vmatprep.mubr.bf16.mxu0 0
    %178 = vmatmul.mubr.bf16.gmra.mrb[0].mxu0 %v139
    %v179 = vpop.f32.mrb[0].mxu0
    %v180 = vadd.f32 0.0, %v179
    %v181 = vpop.f32.mrb[0].mxu0
    %v182 = vpop.f32.mrb[0].mxu0
    %v183 = vadd.f32 0.0, %v182
    %v184 = vpop.f32.mrb[0].mxu0
    %185 = vdwg.mxu0
    %v188 = vunpack.c.l.b16 %v59
    %v189 = vunpack.c.l.b16 %v60
    %v190 = vpack.c.b16 %v189, %v188
    %192 = vrot.lane.b32.xlu0 %v131, 112
    %v193 = vpop.permute.xlu0 %192
    %v195 = vsel %vm137, %v190, 0
    %v198 = vsel %vm141, %v193, 0
    %200 = vmatprep.subr.bf16.mxu0 0
    %201 = vmatpush1.bf16.msra.mxu0 %v198
    %202 = vmatprep.subr.bf16.mxu0 0
    %203 = vmatpush1.bf16.msra.mxu0 0
    %204 = vmatprep.subr.bf16.mxu0 0
    %205 = vmatpush1.bf16.msra.mxu0 0
    %206 = vmatprep.subr.bf16.mxu0 0
    %207 = vmatpush1.bf16.msra.mxu0 0
    %208 = vmatprep.subr.bf16.mxu0 0
    %209 = vmatpush1.bf16.msra.mxu0 0
    %210 = vmatprep.subr.bf16.mxu0 0
    %211 = vmatpush1.bf16.msra.mxu0 0
    %212 = vmatprep.subr.bf16.mxu0 0
    %213 = vmatpush1.bf16.msra.mxu0 0
    %214 = vmatprep.subr.bf16.mxu0 0
    %215 = vmatpush1.bf16.msra.mxu0 0
    %216 = vmatprep.subr.bf16.mxu0 0
    %217 = vmatpush1.bf16.msra.mxu0 0
    %218 = vmatprep.subr.bf16.mxu0 0
    %219 = vmatpush1.bf16.msra.mxu0 0
    %220 = vmatprep.subr.bf16.mxu0 0
    %221 = vmatpush1.bf16.msra.mxu0 0
    %222 = vmatprep.subr.bf16.mxu0 0
    %223 = vmatpush1.bf16.msra.mxu0 0
    %224 = vmatprep.subr.bf16.mxu0 0
    %225 = vmatpush1.bf16.msra.mxu0 0
    %226 = vmatprep.subr.bf16.mxu0 0
    %227 = vmatpush1.bf16.msra.mxu0 0
    %228 = vmatprep.subr.bf16.mxu0 0
    %229 = vmatpush1.bf16.msra.mxu0 0
    %230 = vmatprep.subr.bf16.mxu0 0
    %231 = vmatpush1.bf16.msra.mxu0 0
    %232 = vmatprep.mubr.bf16.mxu0 0
    %233 = vmatmul.mubr.bf16.gmra.mrb[0].mxu0 %v195
    %v234 = vpop.f32.mrb[0].mxu0
    %v235 = vadd.f32 %v180, %v234
    %v236 = vpop.f32.mrb[0].mxu0
    %v237 = vpop.f32.mrb[0].mxu0
    %v238 = vadd.f32 %v183, %v237
    %v239 = vpop.f32.mrb[0].mxu0
    %240 = vdwg.mxu0
    %vm241 = vcmp.gt.f32.partialorder %v235, 0.0
    %vm242 = vcmp.gt.f32.partialorder %v238, 0.0
    %v243 = vmul.f32 %v235, 0.2
    %v244 = vmul.f32 %v238, 0.2
    %v245 = vsel %vm241, %v235, %v243
    %v246 = vsel %vm242, %v238, %v244
    %v247 = vld [vmem:[%s7] sm:$0x1]
    %v249 = vlaneseq
    %v250 = vshrl.u32 %v249, 7
    %v251 = vsub.s32 0, %v250
    %v252 = vrot.slane %v247, %v251
    %v254 = vmul.f32 %v245, %v252
    %v255 = vmul.f32 %v246, %v252
    %v256 = vld [vmem:[%s8] sm:$0xff]
    %v257 = vld [vmem:[%s8 + $0x8] sm:$0xff]
    %vm258 = vcmask 130048
    %v260 = vsel %vm258, %v254, 0
    %v263 = vsel %vm258, %v255, 0
    %265 = vmatprep.subr.mxu0 0.0
    %266 = vmatpush1.msra.mxu0 %v256
    %267 = vmatprep.subr.mxu0 0.0
    %268 = vmatpush1.msra.mxu0 %v257
    %269 = vmatprep.subr.mxu0 0.0
    %270 = vmatpush1.msra.mxu0 0.0
    %271 = vmatprep.subr.mxu0 0.0
    %272 = vmatpush1.msra.mxu0 0.0
    %273 = vmatprep.subr.mxu0 0.0
    %274 = vmatpush1.msra.mxu0 0.0
    %275 = vmatprep.subr.mxu0 0.0
    %276 = vmatpush1.msra.mxu0 0.0
    %277 = vmatprep.subr.mxu0 0.0
    %278 = vmatpush1.msra.mxu0 0.0
    %279 = vmatprep.subr.mxu0 0.0
    %280 = vmatpush1.msra.mxu0 0.0
    %281 = vmatprep.subr.mxu0 0.0
    %282 = vmatpush1.msra.mxu0 0.0
    %283 = vmatprep.subr.mxu0 0.0
    %284 = vmatpush1.msra.mxu0 0.0
    %285 = vmatprep.subr.mxu0 0.0
    %286 = vmatpush1.msra.mxu0 0.0
    %287 = vmatprep.subr.mxu0 0.0
    %288 = vmatpush1.msra.mxu0 0.0
    %289 = vmatprep.subr.mxu0 0.0
    %290 = vmatpush1.msra.mxu0 0.0
    %291 = vmatprep.subr.mxu0 0.0
    %292 = vmatpush1.msra.mxu0 0.0
    %293 = vmatprep.subr.mxu0 0.0
    %294 = vmatpush1.msra.mxu0 0.0
    %295 = vmatprep.subr.mxu0 0.0
    %296 = vmatpush1.msra.mxu0 0.0
    %297 = vmatprep.subr.mxu0 0.0
    %298 = vmatpush1.msra.mxu0 0.0
    %299 = vmatprep.subr.mxu0 0.0
    %300 = vmatpush1.msra.mxu0 0.0
    %301 = vmatprep.subr.mxu0 0.0
    %302 = vmatpush1.msra.mxu0 0.0
    %303 = vmatprep.subr.mxu0 0.0
    %304 = vmatpush1.msra.mxu0 0.0
    %305 = vmatprep.subr.mxu0 0.0
    %306 = vmatpush1.msra.mxu0 0.0
    %307 = vmatprep.subr.mxu0 0.0
    %308 = vmatpush1.msra.mxu0 0.0
    %309 = vmatprep.subr.mxu0 0.0
    %310 = vmatpush1.msra.mxu0 0.0
    %311 = vmatprep.subr.mxu0 0.0
    %312 = vmatpush1.msra.mxu0 0.0
    %313 = vmatprep.subr.mxu0 0.0
    %314 = vmatpush1.msra.mxu0 0.0
    %315 = vmatprep.subr.mxu0 0.0
    %316 = vmatpush1.msra.mxu0 0.0
    %317 = vmatprep.subr.mxu0 0.0
    %318 = vmatpush1.msra.mxu0 0.0
    %319 = vmatprep.subr.mxu0 0.0
    %320 = vmatpush1.msra.mxu0 0.0
    %321 = vmatprep.subr.mxu0 0.0
    %322 = vmatpush1.msra.mxu0 0.0
    %323 = vmatprep.subr.mxu0 0.0
    %324 = vmatpush1.msra.mxu0 0.0
    %325 = vmatprep.subr.mxu0 0.0
    %326 = vmatpush1.msra.mxu0 0.0
    %327 = vmatprep.subr.mxu0 0.0
    %328 = vmatpush1.msra.mxu0 0.0
    %329 = vmatprep.mubr.f32.mxu0 0.0
    %330 = vmatmul.mubr.f32.gmra.mrb[0].mxu0 %v260
    %v331 = vpop.f32.mrb[0].mxu0
    %v332 = vadd.f32 0.0, %v331
    %v333 = vpop.f32.mrb[0].mxu0
    %334 = vmatprep.mubr.f32.mxu0 0.0
    %335 = vmatmul.mubr.f32.gmra.mrb[0].mxu0 %v263
    %v336 = vpop.f32.mrb[0].mxu0
    %v337 = vadd.f32 0.0, %v336
    %v338 = vpop.f32.mrb[0].mxu0
    %339 = vdwg.mxu0
    %340 = vxpose.xlu0.b32.start [1/16] %v332, 128
    %341 = vxpose.xlu0.b32.cont [2/16] %v337, 128
    %342 = vxpose.xlu0.b32.cont [3/16] 0.0, 128
    %343 = vxpose.xlu0.b32.cont [4/16] 0.0, 128
    %344 = vxpose.xlu0.b32.cont [5/16] 0.0, 128
    %345 = vxpose.xlu0.b32.cont [6/16] 0.0, 128
    %346 = vxpose.xlu0.b32.cont [7/16] 0.0, 128
    %347 = vxpose.xlu0.b32.cont [8/16] 0.0, 128
    %348 = vxpose.xlu0.b32.cont [9/16] 0.0, 128
    %349 = vxpose.xlu0.b32.cont [10/16] 0.0, 128
    %350 = vxpose.xlu0.b32.cont [11/16] 0.0, 128
    %351 = vxpose.xlu0.b32.cont [12/16] 0.0, 128
    %352 = vxpose.xlu0.b32.cont [13/16] 0.0, 128
    %353 = vxpose.xlu0.b32.cont [14/16] 0.0, 128
    %354 = vxpose.xlu0.b32.cont [15/16] 0.0, 128
    %355 = vxpose.xlu0.b32.end [16/16] 0.0, 128
    %v356 = vpop.trf.xlu0
    %v357 = vpop.trf.xlu0
    %v358 = vpop.trf.xlu0
    %v359 = vpop.trf.xlu0
    %v360 = vpop.trf.xlu0
    %v361 = vpop.trf.xlu0
    %v362 = vpop.trf.xlu0
    %v363 = vpop.trf.xlu0
    %v364 = vpop.trf.xlu0
    %v365 = vpop.trf.xlu0
    %v366 = vpop.trf.xlu0
    %v367 = vpop.trf.xlu0
    %v368 = vpop.trf.xlu0
    %v369 = vpop.trf.xlu0
    %v370 = vpop.trf.xlu0
    %v371 = vpop.trf.xlu0
    %v374 = vunpack.c.l.s4 1966171168
    %v375 = vunpack.c.0.s8 %v374
    %v376 = vlaneseq
    %v377 = vshrl.u32 %v376, 7
    %v378 = vsub.s32 %v375, %v377
    %v379 = vrot.slane %v356, %v378
    %v380 = vcombine.high %v379, %v379
    %v382 = vunpack.c.l.s4 1966171168
    %v383 = vunpack.c.0.s8 %v382
    %v384 = vlaneseq
    %v385 = vshrl.u32 %v384, 7
    %v386 = vsub.s32 %v383, %v385
    %v387 = vrot.slane %v379, %v386
    %v389 = vunpack.c.l.s4 1966171168
    %v390 = vunpack.c.0.s8 %v389
    %v391 = vlaneseq
    %v392 = vshrl.u32 %v391, 7
    %v393 = vsub.s32 %v390, %v392
    %v394 = vrot.slane %v380, %v393
    %v395 = vcombine.high %v387, %v387
    %v396 = vcombine.high %v394, %v394
    %v397 = vsel %vm62, 65537, 0
    %v398 = vunpack.c.l.b16 %v397
    %vm399 = vcmp.ne.s32.totalorder %v398, 0
    %v400 = vsel %vm399, 1, 0
    %vm401 = vcmp.eq.s32.totalorder %v400, 1
    %v402 = vlaneseq
    %v403 = vshrl.u32 %v402, 7
    %v404 = vsub.s32 0, %v403
    %v405 = vrot.slane %v387, %v404
    %v406 = vlaneseq
    %v407 = vshrl.u32 %v406, 7
    %v408 = vsub.s32 0, %v407
    %v409 = vrot.slane %v394, %v408
    %v410 = vlaneseq
    %v411 = vshrl.u32 %v410, 7
    %v412 = vsub.s32 0, %v411
    %v413 = vrot.slane %v395, %v412
    %v414 = vlaneseq
    %v415 = vshrl.u32 %v414, 7
    %v416 = vsub.s32 0, %v415
    %v417 = vrot.slane %v396, %v416
    %v422 = vsel %vm401, %v405, -1e+30
    %v423 = vsel %vm401, %v409, -1e+30
    %v424 = vsel %vm401, %v413, -1e+30
    %v425 = vsel %vm401, %v417, -1e+30
    %v426 = vsel %vm258, %v422, -inf
    %427 = vmax.xlane.f32.xlu0 %v426
    %v428 = vpop.xlane.xlu0 %427
    %v429 = vsel %vm258, %v423, -inf
    %430 = vmax.xlane.f32.xlu0 %v429
    %v431 = vpop.xlane.xlu0 %430
    %v432 = vsel %vm258, %v424, -inf
    %433 = vmax.xlane.f32.xlu0 %v432
    %v434 = vpop.xlane.xlu0 %433
    %v435 = vsel %vm258, %v425, -inf
    %436 = vmax.xlane.f32.xlu0 %v435
    %v437 = vpop.xlane.xlu0 %436
    %v438 = vpack.c.bf16 %v428, %v428
    %v439 = vpack.c.bf16 %v431, %v431
    %v440 = vpack.c.bf16 %v434, %v434
    %v441 = vpack.c.bf16 %v437, %v437
    %v446 = vunpack.c.l.b16 %v438
    %v447 = vunpack.c.l.b16 %v439
    %v448 = vunpack.c.l.b16 %v440
    %v449 = vunpack.c.l.b16 %v441
    %v450 = vlaneseq
    %v451 = vand.u32 %v450, 127
    %v452 = vlaneseq
    %v453 = vshrl.u32 %v452, 7
    %v454 = vsub.s32 %v451, %v453
    %v455 = vrot.slane %v446, %v454
    %v456 = vlaneseq
    %v457 = vshrl.u32 %v456, 7
    %v458 = vsub.s32 %v451, %v457
    %v459 = vrot.slane %v447, %v458
    %v460 = vlaneseq
    %v461 = vshrl.u32 %v460, 7
    %v462 = vsub.s32 %v451, %v461
    %v463 = vrot.slane %v448, %v462
    %v464 = vlaneseq
    %v465 = vshrl.u32 %v464, 7
    %v466 = vsub.s32 %v451, %v465
    %v467 = vrot.slane %v449, %v466
    %vm468 = vcmask 1041409
    %v469 = vsel %vm468, %v459, %v455
    %vm470 = vcmask 1042434
    %v471 = vsel %vm470, %v463, %v469
    %vm472 = vcmask 1043459
    %v473 = vsel %vm472, %v467, %v471
    %v474 = vpack.c.b16 %v473, %v473
    %v476 = vsel %vm137, %v474, 0
    %v479 = vsel %vm141, %v61, 0
    %481 = vmatprep.subr.bf16.mxu0 0
    %482 = vmatpush1.bf16.msra.mxu0 %v479
    %483 = vmatprep.subr.bf16.mxu0 0
    %484 = vmatpush1.bf16.msra.mxu0 0
    %485 = vmatprep.subr.bf16.mxu0 0
    %486 = vmatpush1.bf16.msra.mxu0 0
    %487 = vmatprep.subr.bf16.mxu0 0
    %488 = vmatpush1.bf16.msra.mxu0 0
    %489 = vmatprep.subr.bf16.mxu0 0
    %490 = vmatpush1.bf16.msra.mxu0 0
    %491 = vmatprep.subr.bf16.mxu0 0
    %492 = vmatpush1.bf16.msra.mxu0 0
    %493 = vmatprep.subr.bf16.mxu0 0
    %494 = vmatpush1.bf16.msra.mxu0 0
    %495 = vmatprep.subr.bf16.mxu0 0
    %496 = vmatpush1.bf16.msra.mxu0 0
    %497 = vmatprep.subr.bf16.mxu0 0
    %498 = vmatpush1.bf16.msra.mxu0 0
    %499 = vmatprep.subr.bf16.mxu0 0
    %500 = vmatpush1.bf16.msra.mxu0 0
    %501 = vmatprep.subr.bf16.mxu0 0
    %502 = vmatpush1.bf16.msra.mxu0 0
    %503 = vmatprep.subr.bf16.mxu0 0
    %504 = vmatpush1.bf16.msra.mxu0 0
    %505 = vmatprep.subr.bf16.mxu0 0
    %506 = vmatpush1.bf16.msra.mxu0 0
    %507 = vmatprep.subr.bf16.mxu0 0
    %508 = vmatpush1.bf16.msra.mxu0 0
    %509 = vmatprep.subr.bf16.mxu0 0
    %510 = vmatpush1.bf16.msra.mxu0 0
    %511 = vmatprep.subr.bf16.mxu0 0
    %512 = vmatpush1.bf16.msra.mxu0 0
    %513 = vmatprep.mubr.bf16.mxu0 0
    %514 = vmatmul.mubr.bf16.gmra.mrb[0].mxu0 %v476
    %v515 = vpop.f32.mrb[0].mxu0
    %v516 = vadd.f32 0.0, %v515
    %v517 = vpop.f32.mrb[0].mxu0
    %v518 = vpop.f32.mrb[0].mxu0
    %v519 = vpop.f32.mrb[0].mxu0
    %520 = vdwg.mxu0
    %v521 = vsub.f32 %v356, %v516
    %v522 = vmul.f32 %v521, 1.442695
    %v523 = vpow.pop %v522
    %v524 = vpack.c.bf16 %v523, %v523
    %v527 = vsel %vm258, %v524, 0
    %529 = vmatprep.subr.bf16.mxu0 0
    %530 = vmatpush1.bf16.msra.mxu0 %v190
    %531 = vmatprep.subr.bf16.mxu0 0
    %532 = vmatpush1.bf16.msra.mxu0 0
    %533 = vmatprep.subr.bf16.mxu0 0
    %534 = vmatpush1.bf16.msra.mxu0 0
    %535 = vmatprep.subr.bf16.mxu0 0
    %536 = vmatpush1.bf16.msra.mxu0 0
    %537 = vmatprep.subr.bf16.mxu0 0
    %538 = vmatpush1.bf16.msra.mxu0 0
    %539 = vmatprep.subr.bf16.mxu0 0
    %540 = vmatpush1.bf16.msra.mxu0 0
    %541 = vmatprep.subr.bf16.mxu0 0
    %542 = vmatpush1.bf16.msra.mxu0 0
    %543 = vmatprep.subr.bf16.mxu0 0
    %544 = vmatpush1.bf16.msra.mxu0 0
    %545 = vmatprep.subr.bf16.mxu0 0
    %546 = vmatpush1.bf16.msra.mxu0 0
    %547 = vmatprep.subr.bf16.mxu0 0
    %548 = vmatpush1.bf16.msra.mxu0 0
    %549 = vmatprep.subr.bf16.mxu0 0
    %550 = vmatpush1.bf16.msra.mxu0 0
    %551 = vmatprep.subr.bf16.mxu0 0
    %552 = vmatpush1.bf16.msra.mxu0 0
    %553 = vmatprep.subr.bf16.mxu0 0
    %554 = vmatpush1.bf16.msra.mxu0 0
    %555 = vmatprep.subr.bf16.mxu0 0
    %556 = vmatpush1.bf16.msra.mxu0 0
    %557 = vmatprep.subr.bf16.mxu0 0
    %558 = vmatpush1.bf16.msra.mxu0 0
    %559 = vmatprep.subr.bf16.mxu0 0
    %560 = vmatpush1.bf16.msra.mxu0 0
    %561 = vmatprep.mubr.bf16.mxu0 0
    %562 = vmatmul.mubr.bf16.gmra.mrb[0].mxu0 %v527
    %v563 = vpop.f32.mrb[0].mxu0
    %v564 = vadd.f32 0.0, %v563
    %v565 = vpop.f32.mrb[0].mxu0
    %v566 = vpop.f32.mrb[0].mxu0
    %v567 = vpop.f32.mrb[0].mxu0
    %568 = vdwg.mxu0
    %v569 = vpack.c.bf16 %v564, %v564
    %v571 = vsel %vm137, %v569, 0
    %573 = vmatprep.subr.bf16.mxu0 0
    %574 = vmatpush1.bf16.msra.mxu0 %v479
    %575 = vmatprep.subr.bf16.mxu0 0
    %576 = vmatpush1.bf16.msra.mxu0 0
    %577 = vmatprep.subr.bf16.mxu0 0
    %578 = vmatpush1.bf16.msra.mxu0 0
    %579 = vmatprep.subr.bf16.mxu0 0
    %580 = vmatpush1.bf16.msra.mxu0 0
    %581 = vmatprep.subr.bf16.mxu0 0
    %582 = vmatpush1.bf16.msra.mxu0 0
    %583 = vmatprep.subr.bf16.mxu0 0
    %584 = vmatpush1.bf16.msra.mxu0 0
    %585 = vmatprep.subr.bf16.mxu0 0
    %586 = vmatpush1.bf16.msra.mxu0 0
    %587 = vmatprep.subr.bf16.mxu0 0
    %588 = vmatpush1.bf16.msra.mxu0 0
    %589 = vmatprep.subr.bf16.mxu0 0
    %590 = vmatpush1.bf16.msra.mxu0 0
    %591 = vmatprep.subr.bf16.mxu0 0
    %592 = vmatpush1.bf16.msra.mxu0 0
    %593 = vmatprep.subr.bf16.mxu0 0
    %594 = vmatpush1.bf16.msra.mxu0 0
    %595 = vmatprep.subr.bf16.mxu0 0
    %596 = vmatpush1.bf16.msra.mxu0 0
    %597 = vmatprep.subr.bf16.mxu0 0
    %598 = vmatpush1.bf16.msra.mxu0 0
    %599 = vmatprep.subr.bf16.mxu0 0
    %600 = vmatpush1.bf16.msra.mxu0 0
    %601 = vmatprep.subr.bf16.mxu0 0
    %602 = vmatpush1.bf16.msra.mxu0 0
    %603 = vmatprep.subr.bf16.mxu0 0
    %604 = vmatpush1.bf16.msra.mxu0 0
    %605 = vmatprep.mubr.bf16.mxu0 0
    %606 = vmatmul.mubr.bf16.gmra.mrb[0].mxu0 %v571
    %v607 = vpop.f32.mrb[0].mxu0
    %v608 = vadd.f32 0.0, %v607
    %v609 = vpop.f32.mrb[0].mxu0
    %v610 = vpop.f32.mrb[0].mxu0
    %v611 = vpop.f32.mrb[0].mxu0
    %612 = vdwg.mxu0
    %v613 = vrcp.pop %v608
    %v614 = vmul.f32 %v523, %v613
    %vm615 = vcmask 125952
    %616 = vst.msk [vmem:[#allocation4] sm:$0xf] %vm615, %v614
    %617 = vxpose.xlu0.b32.start [1/16] %v614, 128
    %618 = vxpose.xlu0.b32.cont [2/16] 0.0, 128
    %619 = vxpose.xlu0.b32.cont [3/16] 0.0, 128
    %620 = vxpose.xlu0.b32.cont [4/16] 0.0, 128
    %621 = vxpose.xlu0.b32.cont [5/16] 0.0, 128
    %622 = vxpose.xlu0.b32.cont [6/16] 0.0, 128
    %623 = vxpose.xlu0.b32.cont [7/16] 0.0, 128
    %624 = vxpose.xlu0.b32.cont [8/16] 0.0, 128
    %625 = vxpose.xlu0.b32.cont [9/16] 0.0, 128
    %626 = vxpose.xlu0.b32.cont [10/16] 0.0, 128
    %627 = vxpose.xlu0.b32.cont [11/16] 0.0, 128
    %628 = vxpose.xlu0.b32.cont [12/16] 0.0, 128
    %629 = vxpose.xlu0.b32.cont [13/16] 0.0, 128
    %630 = vxpose.xlu0.b32.cont [14/16] 0.0, 128
    %631 = vxpose.xlu0.b32.cont [15/16] 0.0, 128
    %632 = vxpose.xlu0.b32.end [16/16] 0.0, 128
    %v633 = vpop.trf.xlu0
    %v634 = vpop.trf.xlu0
    %v635 = vpop.trf.xlu0
    %v636 = vpop.trf.xlu0
    %v637 = vpop.trf.xlu0
    %v638 = vpop.trf.xlu0
    %v639 = vpop.trf.xlu0
    %v640 = vpop.trf.xlu0
    %v641 = vpop.trf.xlu0
    %v642 = vpop.trf.xlu0
    %v643 = vpop.trf.xlu0
    %v644 = vpop.trf.xlu0
    %v645 = vpop.trf.xlu0
    %v646 = vpop.trf.xlu0
    %v647 = vpop.trf.xlu0
    %v648 = vpop.trf.xlu0
    %v649 = vld [vmem:[%s9] sm:$0xf]
    %vm650 = vcmask 31744
    %v652 = vsel %vm650, %v633, 0
    %v655 = vsel %vm650, %v634, 0
    %v658 = vsel %vm141, %v649, 0
    %660 = vmatprep.subr.mxu0 0.0
    %661 = vmatpush1.msra.mxu0 %v658
    %662 = vmatprep.subr.mxu0 0.0
    %663 = vmatpush1.msra.mxu0 0.0
    %664 = vmatprep.subr.mxu0 0.0
    %665 = vmatpush1.msra.mxu0 0.0
    %666 = vmatprep.subr.mxu0 0.0
    %667 = vmatpush1.msra.mxu0 0.0
    %668 = vmatprep.subr.mxu0 0.0
    %669 = vmatpush1.msra.mxu0 0.0
    %670 = vmatprep.subr.mxu0 0.0
    %671 = vmatpush1.msra.mxu0 0.0
    %672 = vmatprep.subr.mxu0 0.0
    %673 = vmatpush1.msra.mxu0 0.0
    %674 = vmatprep.subr.mxu0 0.0
    %675 = vmatpush1.msra.mxu0 0.0
    %676 = vmatprep.subr.mxu0 0.0
    %677 = vmatpush1.msra.mxu0 0.0
    %678 = vmatprep.subr.mxu0 0.0
    %679 = vmatpush1.msra.mxu0 0.0
    %680 = vmatprep.subr.mxu0 0.0
    %681 = vmatpush1.msra.mxu0 0.0
    %682 = vmatprep.subr.mxu0 0.0
    %683 = vmatpush1.msra.mxu0 0.0
    %684 = vmatprep.subr.mxu0 0.0
    %685 = vmatpush1.msra.mxu0 0.0
    %686 = vmatprep.subr.mxu0 0.0
    %687 = vmatpush1.msra.mxu0 0.0
    %688 = vmatprep.subr.mxu0 0.0
    %689 = vmatpush1.msra.mxu0 0.0
    %690 = vmatprep.subr.mxu0 0.0
    %691 = vmatpush1.msra.mxu0 0.0
    %692 = vmatprep.subr.mxu0 0.0
    %693 = vmatpush1.msra.mxu0 0.0
    %694 = vmatprep.subr.mxu0 0.0
    %695 = vmatpush1.msra.mxu0 0.0
    %696 = vmatprep.subr.mxu0 0.0
    %697 = vmatpush1.msra.mxu0 0.0
    %698 = vmatprep.subr.mxu0 0.0
    %699 = vmatpush1.msra.mxu0 0.0
    %700 = vmatprep.subr.mxu0 0.0
    %701 = vmatpush1.msra.mxu0 0.0
    %702 = vmatprep.subr.mxu0 0.0
    %703 = vmatpush1.msra.mxu0 0.0
    %704 = vmatprep.subr.mxu0 0.0
    %705 = vmatpush1.msra.mxu0 0.0
    %706 = vmatprep.subr.mxu0 0.0
    %707 = vmatpush1.msra.mxu0 0.0
    %708 = vmatprep.subr.mxu0 0.0
    %709 = vmatpush1.msra.mxu0 0.0
    %710 = vmatprep.subr.mxu0 0.0
    %711 = vmatpush1.msra.mxu0 0.0
    %712 = vmatprep.subr.mxu0 0.0
    %713 = vmatpush1.msra.mxu0 0.0
    %714 = vmatprep.subr.mxu0 0.0
    %715 = vmatpush1.msra.mxu0 0.0
    %716 = vmatprep.subr.mxu0 0.0
    %717 = vmatpush1.msra.mxu0 0.0
    %718 = vmatprep.subr.mxu0 0.0
    %719 = vmatpush1.msra.mxu0 0.0
    %720 = vmatprep.subr.mxu0 0.0
    %721 = vmatpush1.msra.mxu0 0.0
    %722 = vmatprep.subr.mxu0 0.0
    %723 = vmatpush1.msra.mxu0 0.0
    %724 = vmatprep.mubr.f32.mxu0 0.0
    %725 = vmatmul.mubr.f32.gmra.mrb[0].mxu0 %v652
    %v726 = vpop.f32.mrb[0].mxu0
    %v727 = vadd.f32 0.0, %v726
    %v728 = vpop.f32.mrb[0].mxu0
    %729 = vmatprep.mubr.f32.mxu0 0.0
    %730 = vmatmul.mubr.f32.gmra.mrb[0].mxu0 %v655
    %v731 = vpop.f32.mrb[0].mxu0
    %v732 = vadd.f32 0.0, %v731
    %v733 = vpop.f32.mrb[0].mxu0
    %734 = vdwg.mxu0
    %v735 = vmul.f32 %v180, %v727
    %v736 = vmul.f32 %v183, %v732
    %v737 = vpack.c.bf16 %v736, %v735
    %v738 = vld [vmem:[%s10] sm:$0x1]
    %v740 = vlaneseq
    %v741 = vshrl.u32 %v740, 7
    %v742 = vsub.s32 0, %v741
    %v743 = vrot.slane %v738, %v742
    %v745 = vsel %vm258, %v61, 0
    %747 = vmatprep.subr.bf16.mxu0 0
    %748 = vmatpush1.bf16.msra.mxu0 %v737
    %749 = vmatprep.subr.bf16.mxu0 0
    %750 = vmatpush1.bf16.msra.mxu0 0
    %751 = vmatprep.subr.bf16.mxu0 0
    %752 = vmatpush1.bf16.msra.mxu0 0
    %753 = vmatprep.subr.bf16.mxu0 0
    %754 = vmatpush1.bf16.msra.mxu0 0
    %755 = vmatprep.subr.bf16.mxu0 0
    %756 = vmatpush1.bf16.msra.mxu0 0
    %757 = vmatprep.subr.bf16.mxu0 0
    %758 = vmatpush1.bf16.msra.mxu0 0
    %759 = vmatprep.subr.bf16.mxu0 0
    %760 = vmatpush1.bf16.msra.mxu0 0
    %761 = vmatprep.subr.bf16.mxu0 0
    %762 = vmatpush1.bf16.msra.mxu0 0
    %763 = vmatprep.subr.bf16.mxu0 0
    %764 = vmatpush1.bf16.msra.mxu0 0
    %765 = vmatprep.subr.bf16.mxu0 0
    %766 = vmatpush1.bf16.msra.mxu0 0
    %767 = vmatprep.subr.bf16.mxu0 0
    %768 = vmatpush1.bf16.msra.mxu0 0
    %769 = vmatprep.subr.bf16.mxu0 0
    %770 = vmatpush1.bf16.msra.mxu0 0
    %771 = vmatprep.subr.bf16.mxu0 0
    %772 = vmatpush1.bf16.msra.mxu0 0
    %773 = vmatprep.subr.bf16.mxu0 0
    %774 = vmatpush1.bf16.msra.mxu0 0
    %775 = vmatprep.subr.bf16.mxu0 0
    %776 = vmatpush1.bf16.msra.mxu0 0
    %777 = vmatprep.subr.bf16.mxu0 0
    %778 = vmatpush1.bf16.msra.mxu0 0
    %779 = vmatprep.mubr.bf16.mxu0 0
    %780 = vmatmul.mubr.bf16.gmra.mrb[0].mxu0 %v745
    %v781 = vpop.f32.mrb[0].mxu0
    %v782 = vadd.f32 %v743, %v781
    %v783 = vpop.f32.mrb[0].mxu0
    %v784 = vpop.f32.mrb[0].mxu0
    %v785 = vpop.f32.mrb[0].mxu0
    %786 = vdwg.mxu0
    %v787 = vsel %vm258, %v782, 0.0
    %v788 = vrot.slane %v787, 4
    %v789 = vadd.f32 %v787, %v788
    %v790 = vrot.slane %v789, 2
    %v791 = vadd.f32 %v789, %v790
    %v792 = vrot.slane %v791, 1
    %v793 = vadd.f32 %v791, %v792
    %v794 = vrcp.pop 8.0
    %v795 = vmul.f32 %v793, %v794
    %v796 = vsub.f32 %v782, %v795
    %v797 = vmul.f32 %v796, %v796
    %v798 = vsel %vm258, %v797, 0.0
    %v799 = vrot.slane %v798, 4
    %v800 = vadd.f32 %v798, %v799
    %v801 = vrot.slane %v800, 2
    %v802 = vadd.f32 %v800, %v801
    %v803 = vrot.slane %v802, 1
    %v804 = vadd.f32 %v802, %v803
    %v805 = vmul.f32 %v804, %v794
    %v806 = vadd.f32 %v805, 1e-05
    %v807 = vrsqrt.pop %v806
    %v808 = vmul.f32 %v796, %v807
    %v809 = vld [vmem:[%s13] sm:$0x1]
    %v811 = vlaneseq
    %v812 = vshrl.u32 %v811, 7
    %v813 = vsub.s32 0, %v812
    %v814 = vrot.slane %v809, %v813
    %v816 = vmul.f32 %v808, %v814
    %v817 = vld [vmem:[%s14] sm:$0x1]
    %v819 = vlaneseq
    %v820 = vshrl.u32 %v819, 7
    %v821 = vsub.s32 0, %v820
    %v822 = vrot.slane %v817, %v821
    %v824 = vadd.f32 %v816, %v822
    %vm825 = vcmp.gt.f32.partialorder %v824, 0.0
    %v826 = vmul.f32 %v824, 0.01
    %v827 = vsel %vm825, %v824, %v826
    %828 = vst.msk [vmem:[#allocation2] sm:$0xff] %vm258, %v827
    %v829 = vld [vmem:[%s1] sm:$0xf]
    %v830 = vld [vmem:[%s11] sm:$0xf]
    %v831 = vld [vmem:[%s11 + $0x4] sm:$0xf]
    %v832 = vld [vmem:[%s11 + $0x8] sm:$0xf]
    %v833 = vld [vmem:[%s11 + $0xc] sm:$0xf]
    %v834 = vld [vmem:[%s11 + $0x10] sm:$0xf]
    %v835 = vld [vmem:[%s11 + $0x14] sm:$0xf]
    %v836 = vld [vmem:[%s11 + $0x18] sm:$0xf]
    %v837 = vld [vmem:[%s11 + $0x1c] sm:$0xf]
    %v838 = vld [vmem:[%s11 + $0x20] sm:$0xf]
    %v839 = vld [vmem:[%s11 + $0x24] sm:$0xf]
    %v840 = vld [vmem:[%s11 + $0x28] sm:$0xf]
    %v841 = vld [vmem:[%s11 + $0x2c] sm:$0xf]
    %v842 = vld [vmem:[%s12] sm:$0x1]
    %v844 = vlaneseq
    %v845 = vshrl.u32 %v844, 7
    %v846 = vsub.s32 0, %v845
    %v847 = vrot.slane %v842, %v846
    %v861 = vunpack.c.l.b16 %v830
    %v862 = vunpack.c.l.b16 %v831
    %v863 = vunpack.c.l.b16 %v832
    %v864 = vunpack.c.l.b16 %v833
    %v865 = vunpack.c.l.b16 %v834
    %v866 = vunpack.c.l.b16 %v835
    %v867 = vunpack.c.l.b16 %v836
    %v868 = vunpack.c.l.b16 %v837
    %v869 = vunpack.c.l.b16 %v838
    %v870 = vunpack.c.l.b16 %v839
    %v871 = vunpack.c.l.b16 %v840
    %v872 = vunpack.c.l.b16 %v841
    %v873 = vpack.c.b16 %v862, %v861
    %v874 = vpack.c.b16 %v864, %v863
    %v875 = vpack.c.b16 %v866, %v865
    %v876 = vpack.c.b16 %v868, %v867
    %v877 = vpack.c.b16 %v870, %v869
    %v878 = vpack.c.b16 %v872, %v871
    %vm885 = vcmask 785408
    %v887 = vsel %vm885, %v829, 0
    %889 = vmatprep.subr.bf16.mxu0 0
    %890 = vmatpush1.bf16.msra.mxu0 %v873
    %891 = vmatprep.subr.bf16.mxu0 0
    %892 = vmatpush1.bf16.msra.mxu0 %v874
    %893 = vmatprep.subr.bf16.mxu0 0
    %894 = vmatpush1.bf16.msra.mxu0 %v875
    %895 = vmatprep.subr.bf16.mxu0 0
    %896 = vmatpush1.bf16.msra.mxu0 %v876
    %897 = vmatprep.subr.bf16.mxu0 0
    %898 = vmatpush1.bf16.msra.mxu0 %v877
    %899 = vmatprep.subr.bf16.mxu0 0
    %900 = vmatpush1.bf16.msra.mxu0 %v878
    %901 = vmatprep.subr.bf16.mxu0 0
    %902 = vmatpush1.bf16.msra.mxu0 0
    %903 = vmatprep.subr.bf16.mxu0 0
    %904 = vmatpush1.bf16.msra.mxu0 0
    %905 = vmatprep.subr.bf16.mxu0 0
    %906 = vmatpush1.bf16.msra.mxu0 0
    %907 = vmatprep.subr.bf16.mxu0 0
    %908 = vmatpush1.bf16.msra.mxu0 0
    %909 = vmatprep.subr.bf16.mxu0 0
    %910 = vmatpush1.bf16.msra.mxu0 0
    %911 = vmatprep.subr.bf16.mxu0 0
    %912 = vmatpush1.bf16.msra.mxu0 0
    %913 = vmatprep.subr.bf16.mxu0 0
    %914 = vmatpush1.bf16.msra.mxu0 0
    %915 = vmatprep.subr.bf16.mxu0 0
    %916 = vmatpush1.bf16.msra.mxu0 0
    %917 = vmatprep.subr.bf16.mxu0 0
    %918 = vmatpush1.bf16.msra.mxu0 0
    %919 = vmatprep.subr.bf16.mxu0 0
    %920 = vmatpush1.bf16.msra.mxu0 0
    %921 = vmatprep.mubr.bf16.mxu0 0
    %922 = vmatmul.mubr.bf16.gmra.mrb[0].mxu0 %v887
    %v923 = vpop.f32.mrb[0].mxu0
    %v924 = vadd.f32 %v847, %v923
    %v925 = vpop.f32.mrb[0].mxu0
    %v926 = vpop.f32.mrb[0].mxu0
    %v927 = vpop.f32.mrb[0].mxu0
    %928 = vdwg.mxu0
    %v929 = vmax.f32 %v924, 0.0
    %931 = vrot.lane.b32.xlu0 %v929, 16
    %v932 = vpop.permute.xlu0 %931
    %vm934 = vcmask 261248
    %935 = vst.msk [vmem:[#allocation2] sm:$0xff] %vm934, %v932
    // Predicated region
    $region62: #{tpu_custom_call.1} parent=1 // pred_check
      _
    $region63: #{tpu_custom_call.1} parent=1 // pred_check_branch
      %937 = sbr.rel (0) target = $region65
    $region64: #{tpu_custom_call.1} parent=1 // pred_region
      %s939 = ssub.s32 128, 128
      %940 = vsyncadd [#allocation3], %s939
      %s942 = sshll.u32 [#allocation2], 4
      %s943 = int_to_ptr.vmem [resolvable:$true] %s942
      %945 = dma.vmem_to_hbm [thread:$0]  %s943, 128, %s15, [#allocation3]
    $region65: #{tpu_custom_call.1} parent=1 // pred_fallthru
      _
    // Predicated region
    $region66: #{tpu_custom_call.1} parent=1 // pred_check
      _
    $region67: #{tpu_custom_call.1} parent=1 // pred_check_branch
      %947 = sbr.rel (0) target = $region69
    $region68: #{tpu_custom_call.1} parent=1 // pred_region
      %s949 = ssub.s32 64, 64
      %950 = vsyncadd [#allocation5], %s949
      %s952 = sshll.u32 [#allocation4], 4
      %s953 = int_to_ptr.vmem [resolvable:$true] %s952
      %955 = dma.vmem_to_hbm [thread:$0]  %s953, 64, %s16, [#allocation5]
    $region69: #{tpu_custom_call.1} parent=1 // pred_fallthru
      _
    // Predicated region
    $region70: #{tpu_custom_call.1} parent=1 // pred_check
      _
    $region71: #{tpu_custom_call.1} parent=1 // pred_check_branch
      %957 = sbr.rel (0) target = $region73
    $region72: #{tpu_custom_call.1} parent=1 // pred_region
      %958 = dma.done [#allocation3], 128
    $region73: #{tpu_custom_call.1} parent=1 // pred_fallthru
      _
    // Predicated region
    $region74: #{tpu_custom_call.1} parent=1 // pred_check
      _
    $region75: #{tpu_custom_call.1} parent=1 // pred_check_branch
      %960 = sbr.rel (0) target = $region77
    $region76: #{tpu_custom_call.1} parent=1 // pred_region
      %961 = dma.done [#allocation5], 64
    $region77: #{tpu_custom_call.1} parent=1 // pred_fallthru
      _
    %962 = vsyncpa [#allocation3], 1
    %963 = vsyncpa [#allocation5], 1

</llo_original>
